<compile_context>
chip_gen: v6e
topology: v6e:2x2x1
jax: 0.10.0
libtpu: 0.0.40
codegen_flags: <defaults>
</compile_context>

<pallas_src>
import numpy as np
import jax
import jax.numpy as jnp
from jax.experimental import pallas as pl
from jax.experimental.pallas import tpu as pltpu

L_IN = 69              # input sequence length (implied by Linear(305, 1))
K = 5                  # conv kernel size
C1 = 5                 # conv1 out channels
C2 = 5                 # conv2 out channels
L1 = L_IN - (K - 1)    # 65
L2 = L1 - (K - 1)      # 61
F1 = C1 * L1           # 325
F2 = C2 * L2           # 305


def _circonv_kernel(x_ref, w1_ref, b1_ref, w2_ref, b2_ref, w4_ref, b4_ref, y_ref):
    """One batch tile of the whole network: three MXU matmuls + relu/sigmoid."""
    x = x_ref[...]                                                    # (TB, 69)
    h1 = jnp.maximum(
        jnp.dot(x, w1_ref[...], preferred_element_type=jnp.float32) + b1_ref[...],
        0.0)                                                          # (TB, 325)
    h2 = jnp.maximum(
        jnp.dot(h1, w2_ref[...], preferred_element_type=jnp.float32) + b2_ref[...],
        0.0)                                                          # (TB, 305)
    logits = (jnp.dot(h2, w4_ref[...], preferred_element_type=jnp.float32)
              + b4_ref[...])                                          # (TB, 1)
    # exp() runs on the EUP (its own bundle slot); the tiny (TB, 1) divide is
    # negligible next to the MXU work above.
    y_ref[...] = 1.0 / (1.0 + jnp.exp(-logits))


def _build_dense_weights(params):
    """Fold the conv weights into banded dense matrices (host-side, numpy)."""
    w1 = np.asarray(params["w1"], np.float32).reshape(C1, K)   # (5,1,5) -> (5,5)
    b1 = np.asarray(params["b1"], np.float32)                  # (5,)
    w2 = np.asarray(params["w2"], np.float32)                  # (out=5, in=5, k=5)
    b2 = np.asarray(params["b2"], np.float32)                  # (5,)
    w4 = np.asarray(params["w4"], np.float32)                  # (1, 305)
    b4 = np.asarray(params["b4"], np.float32)                  # (1,)

    # conv1 as matmul: h1[b, c*65 + t] = sum_k x[b, t+k] * w1[c, k] + b1[c]
    w1m = np.zeros((L_IN, F1), np.float32)
    t1 = np.arange(L1)
    for c in range(C1):
        for k in range(K):
            w1m[t1 + k, c * L1 + t1] = w1[c, k]
    b1row = np.repeat(b1, L1).reshape(1, F1)

    # conv2 as matmul:
    #   h2[b, c2*61 + t] = sum_{c1,k} h1[b, c1*65 + t + k] * w2[c2, c1, k] + b2[c2]
    w2m = np.zeros((F1, F2), np.float32)
    t2 = np.arange(L2)
    for c2 in range(C2):
        for c1 in range(C1):
            for k in range(K):
                w2m[c1 * L1 + t2 + k, c2 * L2 + t2] = w2[c2, c1, k]
    b2row = np.repeat(b2, L2).reshape(1, F2)

    # Linear(305, 1): torch flatten order is channel-major (c*61 + t), same as
    # the column order of W2m above, so w4 can be used directly.
    w4col = w4.T.copy()                    # (305, 1)
    b4m = b4.reshape(1, 1)

    return (jnp.asarray(w1m), jnp.asarray(b1row), jnp.asarray(w2m),
            jnp.asarray(b2row), jnp.asarray(w4col), jnp.asarray(b4m))


def circonvnet_forward(x, params, *, block_b=1024):
    """x: (B, 69) float32 -> (B, 1) float32 sigmoid probabilities."""
    assert x.ndim == 2 and x.shape[1] == L_IN, x.shape
    B = x.shape[0]
    w1m, b1row, w2m, b2row, w4col, b4m = _build_dense_weights(params)

    # Batch tile: a multiple of 8 sublanes; up to `block_b` rows per grid step.
    tb = min(block_b, max(8, -(-B // 8) * 8))
    bp = -(-B // tb) * tb                    # pad B up to a multiple of tb
    if bp != B:
        x = jnp.pad(x, ((0, bp - B), (0, 0)))
    grid = (bp // tb,)

    y = pl.pallas_call(
        _circonv_kernel,
        out_shape=jax.ShapeDtypeStruct((bp, 1), jnp.float32),
        grid=grid,
        in_specs=[
            pl.BlockSpec((tb, L_IN), lambda i: (i, 0)),    # x tile (pipelined)
            pl.BlockSpec((L_IN, F1), lambda i: (0, 0)),    # W1m, VMEM-resident
            pl.BlockSpec((1, F1), lambda i: (0, 0)),       # b1 row
            pl.BlockSpec((F1, F2), lambda i: (0, 0)),      # W2m, VMEM-resident
            pl.BlockSpec((1, F2), lambda i: (0, 0)),       # b2 row
            pl.BlockSpec((F2, 1), lambda i: (0, 0)),       # W4 column
            pl.BlockSpec((1, 1), lambda i: (0, 0)),        # b4
        ],
        out_specs=pl.BlockSpec((tb, 1), lambda i: (i, 0)),
        compiler_params=pltpu.CompilerParams(
            dimension_semantics=("parallel",)),
    )(x, w1m, b1row, w2m, b2row, w4col, b4m)

    return y[:B]


def reference_forward(x, params):
    """Pure-JAX (XLA) reference of the PyTorch forward, for validation."""
    w1, b1 = params["w1"], params["b1"]       # (5,1,5), (5,)
    w2, b2 = params["w2"], params["b2"]       # (5,5,5), (5,)
    w4, b4 = params["w4"], params["b4"]       # (1,305), (1,)
    hp = jax.lax.Precision.HIGHEST

    h = x[:, None, :]                                                # (B,1,69)
    h = jax.lax.conv_general_dilated(h, w1, (1,), "VALID",
                                     dimension_numbers=("NCH", "OIH", "NCH"),
                                     precision=hp)
    h = jnp.maximum(h + b1[None, :, None], 0.0)                      # (B,5,65)
    h = jax.lax.conv_general_dilated(h, w2, (1,), "VALID",
                                     dimension_numbers=("NCH", "OIH", "NCH"),
                                     precision=hp)
    h = jnp.maximum(h + b2[None, :, None], 0.0)                      # (B,5,61)
    h = h.reshape(h.shape[0], -1)                                    # (B,305)
    y = jnp.dot(h, w4.T, precision=hp) + b4[None, :]                 # (B,1)
    return 1.0 / (1.0 + jnp.exp(-y))


def make_params(key):
    k1, k2, k3, k4, k5, k6 = jax.random.split(key, 6)
    return {
        "w1": jax.random.uniform(k1, (C1, 1, K), jnp.float32, -0.4, 0.4),
        "b1": jax.random.uniform(k2, (C1,), jnp.float32, -0.4, 0.4),
        "w2": jax.random.uniform(k3, (C2, C1, K), jnp.float32, -0.2, 0.2),
        "b2": jax.random.uniform(k4, (C2,), jnp.float32, -0.2, 0.2),
        "w4": jax.random.uniform(k5, (1, F2), jnp.float32, -0.05, 0.05),
        "b4": jax.random.uniform(k6, (1,), jnp.float32, -0.05, 0.05),
    }


if __name__ == "__main__":
    key = jax.random.PRNGKey(0)
    kx, kp = jax.random.split(key)

    B = 4
    x = jax.random.normal(kx, (B, L_IN), jnp.float32)
    params = make_params(kp)

    y = jax.block_until_ready(circonvnet_forward(x, params))
    y_ref = jax.block_until_ready(reference_forward(x, params))

    assert y.shape == (B, 1), y.shape
    # Post-sigmoid probabilities; tolerance leaves headroom for MXU f32
    # pass-decomposition differences between the Pallas matmuls and the XLA
    # conv reference, while still catching any indexing/layout bug (which
    # would show up as O(0.1) errors).
    assert jnp.allclose(y, y_ref, atol=2e-3, rtol=1e-3), (y, y_ref)

    print("KERNEL_OK")
</pallas_src>

<mosaic_0001>
module attributes {stable_mosaic.version = 11 : i64} {
  func.func @_circonv_kernel(%arg0: i32, %arg1: memref<8x69xf32, #tpu.memory_space<vmem>>, %arg2: memref<69x325xf32, #tpu.memory_space<vmem>>, %arg3: memref<1x325xf32, #tpu.memory_space<vmem>>, %arg4: memref<325x305xf32, #tpu.memory_space<vmem>>, %arg5: memref<1x305xf32, #tpu.memory_space<vmem>>, %arg6: memref<305x1xf32, #tpu.memory_space<vmem>>, %arg7: memref<1x1xf32, #tpu.memory_space<vmem>>, %arg8: memref<8x1xf32, #tpu.memory_space<vmem>>) attributes {dimension_semantics = [#tpu.dimension_semantics<parallel>], iteration_bounds = array<i64: 1>, scalar_prefetch = 0 : i64, scratch_operands = 0 : i64, tpu.core_type = #tpu.core_type<tc>, window_params = [{transform_indices = @transform_0, window_bounds = array<i64: 8, 69>}, {pipeline_mode = #tpu.pipeline_mode<synchronous>, transform_indices = @transform_1, window_bounds = array<i64: 69, 325>}, {pipeline_mode = #tpu.pipeline_mode<synchronous>, transform_indices = @transform_2, window_bounds = array<i64: 1, 325>}, {pipeline_mode = #tpu.pipeline_mode<synchronous>, transform_indices = @transform_3, window_bounds = array<i64: 325, 305>}, {pipeline_mode = #tpu.pipeline_mode<synchronous>, transform_indices = @transform_4, window_bounds = array<i64: 1, 305>}, {pipeline_mode = #tpu.pipeline_mode<synchronous>, transform_indices = @transform_5, window_bounds = array<i64: 305, 1>}, {pipeline_mode = #tpu.pipeline_mode<synchronous>, transform_indices = @transform_6, window_bounds = array<i64: 1, 1>}, {transform_indices = @transform_7, window_bounds = array<i64: 8, 1>}]} {
    %c0 = arith.constant 0 : index
    %c0_0 = arith.constant 0 : index
    %0 = vector.load %arg1[%c0, %c0_0] : memref<8x69xf32, #tpu.memory_space<vmem>>, vector<8x69xf32>
    %c0_1 = arith.constant 0 : index
    %c0_2 = arith.constant 0 : index
    %1 = vector.load %arg2[%c0_1, %c0_2] : memref<69x325xf32, #tpu.memory_space<vmem>>, vector<69x325xf32>
    %cst = arith.constant dense<0.000000e+00> : vector<8x325xf32>
    %2 = tpu.matmul %0, %1, %cst {dimension_numbers = #tpu.dot_dimension_numbers<[1], [0], [0], [1], [0, 0, 1, 1], [], []>} : vector<8x69xf32>, vector<69x325xf32>, vector<8x325xf32> -> vector<8x325xf32>
    %c0_3 = arith.constant 0 : index
    %c0_4 = arith.constant 0 : index
    %3 = vector.load %arg3[%c0_3, %c0_4] : memref<1x325xf32, #tpu.memory_space<vmem>>, vector<1x325xf32>
    %4 = vector.broadcast %3 : vector<1x325xf32> to vector<8x325xf32>
    %5 = arith.addf %2, %4 : vector<8x325xf32>
    %cst_5 = arith.constant 0.000000e+00 : f32
    %6 = vector.broadcast %cst_5 : f32 to vector<8x325xf32>
    %7 = arith.maximumf %5, %6 : vector<8x325xf32>
    %c0_6 = arith.constant 0 : index
    %c0_7 = arith.constant 0 : index
    %8 = vector.load %arg4[%c0_6, %c0_7] : memref<325x305xf32, #tpu.memory_space<vmem>>, vector<325x305xf32>
    %cst_8 = arith.constant dense<0.000000e+00> : vector<8x305xf32>
    %9 = tpu.matmul %7, %8, %cst_8 {dimension_numbers = #tpu.dot_dimension_numbers<[1], [0], [0], [1], [0, 0, 1, 1], [], []>} : vector<8x325xf32>, vector<325x305xf32>, vector<8x305xf32> -> vector<8x305xf32>
    %c0_9 = arith.constant 0 : index
    %c0_10 = arith.constant 0 : index
    %10 = vector.load %arg5[%c0_9, %c0_10] : memref<1x305xf32, #tpu.memory_space<vmem>>, vector<1x305xf32>
    %11 = vector.broadcast %10 : vector<1x305xf32> to vector<8x305xf32>
    %12 = arith.addf %9, %11 : vector<8x305xf32>
    %cst_11 = arith.constant 0.000000e+00 : f32
    %13 = vector.broadcast %cst_11 : f32 to vector<8x305xf32>
    %14 = arith.maximumf %12, %13 : vector<8x305xf32>
    %c0_12 = arith.constant 0 : index
    %c0_13 = arith.constant 0 : index
    %15 = vector.load %arg6[%c0_12, %c0_13] : memref<305x1xf32, #tpu.memory_space<vmem>>, vector<305x1xf32>
    %cst_14 = arith.constant dense<0.000000e+00> : vector<8x1xf32>
    %16 = tpu.matmul %14, %15, %cst_14 {dimension_numbers = #tpu.dot_dimension_numbers<[1], [0], [0], [1], [0, 0, 1, 1], [], []>} : vector<8x305xf32>, vector<305x1xf32>, vector<8x1xf32> -> vector<8x1xf32>
    %c0_15 = arith.constant 0 : index
    %c0_16 = arith.constant 0 : index
    %17 = vector.load %arg7[%c0_15, %c0_16] : memref<1x1xf32, #tpu.memory_space<vmem>>, vector<1x1xf32>
    %18 = vector.broadcast %17 : vector<1x1xf32> to vector<8x1xf32>
    %19 = arith.addf %16, %18 : vector<8x1xf32>
    %cst_17 = arith.constant 0.000000e+00 : f32
    %20 = vector.broadcast %cst_17 : f32 to vector<8x1xf32>
    %21 = arith.subf %20, %19 : vector<8x1xf32>
    %22 = math.exp %21 : vector<8x1xf32>
    %cst_18 = arith.constant 1.000000e+00 : f32
    %23 = vector.broadcast %cst_18 : f32 to vector<8x1xf32>
    %24 = arith.addf %23, %22 : vector<8x1xf32>
    %cst_19 = arith.constant 1.000000e+00 : f32
    %25 = vector.broadcast %cst_19 : f32 to vector<8x1xf32>
    %26 = arith.divf %25, %24 : vector<8x1xf32>
    %c0_20 = arith.constant 0 : index
    %c0_21 = arith.constant 0 : index
    %27 = vector.load %arg8[%c0_20, %c0_21] : memref<8x1xf32, #tpu.memory_space<vmem>>, vector<8x1xf32>
    tpu.vector_store %arg8[%c0_20, %c0_21], %26 {strides = array<i32>} : memref<8x1xf32, #tpu.memory_space<vmem>>, vector<8x1xf32>,
    return
  }
  func.func @transform_0(%arg0: i32) -> (i32, i32) {
    %c0_i32 = arith.constant 0 : i32
    %c0_i32_0 = arith.constant 0 : i32
    return %arg0, %c0_i32 : i32, i32
  }
  func.func @transform_1(%arg0: i32) -> (i32, i32) {
    %c0_i32 = arith.constant 0 : i32
    %c0_i32_0 = arith.constant 0 : i32
    %c0_i32_1 = arith.constant 0 : i32
    return %c0_i32, %c0_i32_0 : i32, i32
  }
  func.func @transform_2(%arg0: i32) -> (i32, i32) {
    %c0_i32 = arith.constant 0 : i32
    %c0_i32_0 = arith.constant 0 : i32
    %c0_i32_1 = arith.constant 0 : i32
    return %c0_i32, %c0_i32_0 : i32, i32
  }
  func.func @transform_3(%arg0: i32) -> (i32, i32) {
    %c0_i32 = arith.constant 0 : i32
    %c0_i32_0 = arith.constant 0 : i32
    %c0_i32_1 = arith.constant 0 : i32
    return %c0_i32, %c0_i32_0 : i32, i32
  }
  func.func @transform_4(%arg0: i32) -> (i32, i32) {
    %c0_i32 = arith.constant 0 : i32
    %c0_i32_0 = arith.constant 0 : i32
    %c0_i32_1 = arith.constant 0 : i32
    return %c0_i32, %c0_i32_0 : i32, i32
  }
  func.func @transform_5(%arg0: i32) -> (i32, i32) {
    %c0_i32 = arith.constant 0 : i32
    %c0_i32_0 = arith.constant 0 : i32
    %c0_i32_1 = arith.constant 0 : i32
    return %c0_i32, %c0_i32_0 : i32, i32
  }
  func.func @transform_6(%arg0: i32) -> (i32, i32) {
    %c0_i32 = arith.constant 0 : i32
    %c0_i32_0 = arith.constant 0 : i32
    %c0_i32_1 = arith.constant 0 : i32
    return %c0_i32, %c0_i32_0 : i32, i32
  }
  func.func @transform_7(%arg0: i32) -> (i32, i32) {
    %c0_i32 = arith.constant 0 : i32
    %c0_i32_0 = arith.constant 0 : i32
    return %arg0, %c0_i32 : i32, i32
  }
}

</mosaic_0001>

<llo_original>
// kernel: tpu_custom_call.1
$region0: #{tpu_custom_call.1}
  #allocation0 [shape = 'u32[]', space=smem, size = 0x4, offset = 0x4, fixed_abs, tag = 'smem constant byte address 0x4 - core index']
  #allocation1 [shape = 'u32[144,128]{1,0:T(1,128)}', space=vmem, size = 0x12000, scoped, tag = 'internal scratch']
  #allocation2 [shape = 'f32[1,1]{1,0:T(1,128)S(1)}', space=vmem, size = 0x200, scoped, tag = 'scoped memory for tpu_custom_call.1']
  %s0 = inlined_call_operand.vmem [shape: f32[8,69], index: 0, kind: input, shape index: {}]
  %s1 = inlined_call_operand.vmem [shape: f32[69,325], index: 1, kind: input, shape index: {}]
  %s2 = inlined_call_operand.vmem [shape: f32[1,325], index: 2, kind: input, shape index: {}]
  %s3 = inlined_call_operand.vmem [shape: f32[325,305], index: 3, kind: input, shape index: {}]
  %s4 = inlined_call_operand.vmem [shape: f32[1,305], index: 4, kind: input, shape index: {}]
  %s5 = inlined_call_operand.vmem [shape: f32[305,1], index: 5, kind: input, shape index: {}]
  %s6 = inlined_call_operand.<no memory space> [shape: f32[1,1], index: 6, kind: input, shape index: {}]
  %s7 = inlined_call_operand.vmem [shape: f32[8,1], index: 7, kind: output, shape index: {}]
  %s8 = sld [smem:[#allocation0]]
  $region38: #{tpu_custom_call.1} parent=0
    _
  %s10 = ssub.s32 1, %s8
  %s11 = scalar_select 0, %s10, %s8
  %v12 = vstv %s6
  %13 = vst [vmem:[#allocation2] sm:$0x1] %v12
  // Predicated region
  $region2: #{tpu_custom_call.1} parent=0 // pred_check
    _
  $region3: #{tpu_custom_call.1} parent=0 // pred_check_branch
    %15 = sbr.rel (0) target = $region5
  $region4: #{tpu_custom_call.1} parent=0 // pred_region
    _
  $region5: #{tpu_custom_call.1} parent=0 // pred_fallthru
    _
  // Predicated region
  $region6: #{tpu_custom_call.1} parent=0 // pred_check
    _
  $region7: #{tpu_custom_call.1} parent=0 // pred_check_branch
    %17 = sbr.rel (0) target = $region9
  $region8: #{tpu_custom_call.1} parent=0 // pred_region
    _
  $region9: #{tpu_custom_call.1} parent=0 // pred_fallthru
    _
  // Predicated region
  $region10: #{tpu_custom_call.1} parent=0 // pred_check
    _
  $region11: #{tpu_custom_call.1} parent=0 // pred_check_branch
    %19 = sbr.rel (0) target = $region13
  $region12: #{tpu_custom_call.1} parent=0 // pred_region
    _
  $region13: #{tpu_custom_call.1} parent=0 // pred_fallthru
    _
  // Predicated region
  $region14: #{tpu_custom_call.1} parent=0 // pred_check
    _
  $region15: #{tpu_custom_call.1} parent=0 // pred_check_branch
    %21 = sbr.rel (0) target = $region17
  $region16: #{tpu_custom_call.1} parent=0 // pred_region
    _
  $region17: #{tpu_custom_call.1} parent=0 // pred_fallthru
    _
  // Predicated region
  $region18: #{tpu_custom_call.1} parent=0 // pred_check
    _
  $region19: #{tpu_custom_call.1} parent=0 // pred_check_branch
    %23 = sbr.rel (0) target = $region21
  $region20: #{tpu_custom_call.1} parent=0 // pred_region
    _
  $region21: #{tpu_custom_call.1} parent=0 // pred_fallthru
    _
  // Predicated region
  $region22: #{tpu_custom_call.1} parent=0 // pred_check
    _
  $region23: #{tpu_custom_call.1} parent=0 // pred_check_branch
    %25 = sbr.rel (0) target = $region25
  $region24: #{tpu_custom_call.1} parent=0 // pred_region
    _
  $region25: #{tpu_custom_call.1} parent=0 // pred_fallthru
    _
  // Predicated region
  $region26: #{tpu_custom_call.1} parent=0 // pred_check
    _
  $region27: #{tpu_custom_call.1} parent=0 // pred_check_branch
    %27 = sbr.rel (0) target = $region29
  $region28: #{tpu_custom_call.1} parent=0 // pred_region
    _
  $region29: #{tpu_custom_call.1} parent=0 // pred_fallthru
    _
  %v28 = vld [vmem:[%s0] sm:$0xff]
  %v29 = vld [vmem:[%s1] sm:$0xff]
  %v30 = vld [vmem:[%s1 + $0x8] sm:$0xff]
  %v31 = vld [vmem:[%s1 + $0x10] sm:$0xff]
  %v32 = vld [vmem:[%s1 + $0x18] sm:$0xff]
  %v33 = vld [vmem:[%s1 + $0x20] sm:$0xff]
  %v34 = vld [vmem:[%s1 + $0x28] sm:$0xff]
  %v35 = vld [vmem:[%s1 + $0x30] sm:$0xff]
  %v36 = vld [vmem:[%s1 + $0x38] sm:$0xff]
  %v37 = vld [vmem:[%s1 + $0x40] sm:$0xff]
  %v38 = vld [vmem:[%s1 + $0x48] sm:$0xff]
  %v39 = vld [vmem:[%s1 + $0x50] sm:$0xff]
  %v40 = vld [vmem:[%s1 + $0x58] sm:$0xff]
  %v41 = vld [vmem:[%s1 + $0x60] sm:$0xff]
  %v42 = vld [vmem:[%s1 + $0x68] sm:$0xff]
  %v43 = vld [vmem:[%s1 + $0x70] sm:$0xff]
  %v44 = vld [vmem:[%s1 + $0x78] sm:$0xff]
  %v45 = vld [vmem:[%s1 + $0x80] sm:$0xff]
  %v46 = vld [vmem:[%s1 + $0x88] sm:$0xff]
  %v47 = vld [vmem:[%s1 + $0x90] sm:$0xff]
  %v48 = vld [vmem:[%s1 + $0x98] sm:$0xff]
  %v49 = vld [vmem:[%s1 + $0xa0] sm:$0xff]
  %v50 = vld [vmem:[%s1 + $0xa8] sm:$0xff]
  %v51 = vld [vmem:[%s1 + $0xb0] sm:$0xff]
  %v52 = vld [vmem:[%s1 + $0xb8] sm:$0xff]
  %v53 = vld [vmem:[%s1 + $0xc0] sm:$0x1f]
  %v54 = vld [vmem:[%s1 + $0xc8] sm:$0x1f]
  %v55 = vld [vmem:[%s1 + $0xd0] sm:$0x1f]
  %v56 = vld [vmem:[%s2] sm:$0x7]
  %v58 = vlaneseq
  %v59 = vshrl.u32 %v58, 7
  %v60 = vsub.s32 0, %v59
  %v61 = vrot.slane %v56, %v60
  %v62 = vlaneseq
  %v63 = vshrl.u32 %v62, 7
  %v64 = vsub.s32 1, %v63
  %v65 = vrot.slane %v56, %v64
  %v66 = vlaneseq
  %v67 = vshrl.u32 %v66, 7
  %v68 = vsub.s32 2, %v67
  %v69 = vrot.slane %v56, %v68
  %vm73 = vcmask 564224
  %v75 = vsel %vm73, %v28, 0
  %vm77 = vcmask 1044480
  %v79 = vsel %vm77, %v53, 0
  %v82 = vsel %vm77, %v54, 0
  %v85 = vsel %vm77, %v55, 0
  %87 = vmatprep.subr.mxu0 0.0
  %88 = vmatpush1.msra.mxu0 0.0
  %89 = vmatprep.subr.mxu0 0.0
  %90 = vmatpush1.msra.mxu0 0.0
  %91 = vmatprep.subr.mxu0 0.0
  %92 = vmatpush1.msra.mxu0 0.0
  %93 = vmatprep.subr.mxu0 0.0
  %94 = vmatpush1.msra.mxu0 0.0
  %95 = vmatprep.subr.mxu0 0.0
  %96 = vmatpush1.msra.mxu0 0.0
  %97 = vmatprep.subr.mxu0 0.0
  %98 = vmatpush1.msra.mxu0 0.0
  %99 = vmatprep.subr.mxu0 0.0
  %100 = vmatpush1.msra.mxu0 0.0
  %101 = vmatprep.subr.mxu0 %v82
  %102 = vmatpush1.msra.mxu0 %v79
  %103 = vmatprep.subr.mxu0 %v51
  %104 = vmatpush1.msra.mxu0 %v50
  %105 = vmatprep.subr.mxu0 %v48
  %106 = vmatpush1.msra.mxu0 %v47
  %107 = vmatprep.subr.mxu0 %v45
  %108 = vmatpush1.msra.mxu0 %v44
  %109 = vmatprep.subr.mxu0 %v42
  %110 = vmatpush1.msra.mxu0 %v41
  %111 = vmatprep.subr.mxu0 %v39
  %112 = vmatpush1.msra.mxu0 %v38
  %113 = vmatprep.subr.mxu0 %v36
  %114 = vmatpush1.msra.mxu0 %v35
  %115 = vmatprep.subr.mxu0 %v33
  %116 = vmatpush1.msra.mxu0 %v32
  %117 = vmatprep.subr.mxu0 %v30
  %118 = vmatpush1.msra.mxu0 %v29
  %119 = vmatprep.subr.mxu0 0.0
  %120 = vmatpush2.msra.mxu0 0.0
  %121 = vmatprep.subr.mxu0 0.0
  %122 = vmatpush2.msra.mxu0 0.0
  %123 = vmatprep.subr.mxu0 0.0
  %124 = vmatpush2.msra.mxu0 0.0
  %125 = vmatprep.subr.mxu0 0.0
  %126 = vmatpush2.msra.mxu0 0.0
  %127 = vmatprep.subr.mxu0 0.0
  %128 = vmatpush2.msra.mxu0 0.0
  %129 = vmatprep.subr.mxu0 0.0
  %130 = vmatpush2.msra.mxu0 0.0
  %131 = vmatprep.subr.mxu0 0.0
  %132 = vmatpush2.msra.mxu0 0.0
  %133 = vmatprep.subr.mxu0 0.0
  %134 = vmatpush2.msra.mxu0 0.0
  %135 = vmatprep.subr.mxu0 0.0
  %136 = vmatpush2.msra.mxu0 0.0
  %137 = vmatprep.subr.mxu0 0.0
  %138 = vmatpush2.msra.mxu0 0.0
  %139 = vmatprep.subr.mxu0 0.0
  %140 = vmatpush2.msra.mxu0 0.0
  %141 = vmatprep.subr.mxu0 0.0
  %142 = vmatpush2.msra.mxu0 0.0
  %143 = vmatprep.subr.mxu0 0.0
  %144 = vmatpush2.msra.mxu0 0.0
  %145 = vmatprep.subr.mxu0 0.0
  %146 = vmatpush2.msra.mxu0 0.0
  %147 = vmatprep.subr.mxu0 0.0
  %148 = vmatpush2.msra.mxu0 0.0
  %149 = vmatprep.subr.mxu0 0.0
  %150 = vmatpush2.msra.mxu0 0.0
  %151 = vmatprep.mubr.f32.mxu0 0.0
  %152 = vmatmul.mubr.f32.gmra.mxu0 %v75
  %v153 = vpop.f32.mrf.mxu0
  %v154 = vadd.f32 %v61, %v153
  %v155 = vpop.f32.mrf.mxu0
  %v156 = vadd.f32 %v65, %v155
  %157 = vdwg.mxu0
  %158 = vmatprep.subr.mxu0 0.0
  %159 = vmatpush1.msra.mxu0 0.0
  %160 = vmatprep.subr.mxu0 0.0
  %161 = vmatpush1.msra.mxu0 0.0
  %162 = vmatprep.subr.mxu0 0.0
  %163 = vmatpush1.msra.mxu0 0.0
  %164 = vmatprep.subr.mxu0 0.0
  %165 = vmatpush1.msra.mxu0 0.0
  %166 = vmatprep.subr.mxu0 0.0
  %167 = vmatpush1.msra.mxu0 0.0
  %168 = vmatprep.subr.mxu0 0.0
  %169 = vmatpush1.msra.mxu0 0.0
  %170 = vmatprep.subr.mxu0 0.0
  %171 = vmatpush1.msra.mxu0 0.0
  %172 = vmatprep.subr.mxu0 0.0
  %173 = vmatpush1.msra.mxu0 %v85
  %174 = vmatprep.subr.mxu0 0.0
  %175 = vmatpush1.msra.mxu0 %v52
  %176 = vmatprep.subr.mxu0 0.0
  %177 = vmatpush1.msra.mxu0 %v49
  %178 = vmatprep.subr.mxu0 0.0
  %179 = vmatpush1.msra.mxu0 %v46
  %180 = vmatprep.subr.mxu0 0.0
  %181 = vmatpush1.msra.mxu0 %v43
  %182 = vmatprep.subr.mxu0 0.0
  %183 = vmatpush1.msra.mxu0 %v40
  %184 = vmatprep.subr.mxu0 0.0
  %185 = vmatpush1.msra.mxu0 %v37
  %186 = vmatprep.subr.mxu0 0.0
  %187 = vmatpush1.msra.mxu0 %v34
  %188 = vmatprep.subr.mxu0 0.0
  %189 = vmatpush1.msra.mxu0 %v31
  %190 = vmatprep.subr.mxu0 0.0
  %191 = vmatpush2.msra.mxu0 0.0
  %192 = vmatprep.subr.mxu0 0.0
  %193 = vmatpush2.msra.mxu0 0.0
  %194 = vmatprep.subr.mxu0 0.0
  %195 = vmatpush2.msra.mxu0 0.0
  %196 = vmatprep.subr.mxu0 0.0
  %197 = vmatpush2.msra.mxu0 0.0
  %198 = vmatprep.subr.mxu0 0.0
  %199 = vmatpush2.msra.mxu0 0.0
  %200 = vmatprep.subr.mxu0 0.0
  %201 = vmatpush2.msra.mxu0 0.0
  %202 = vmatprep.subr.mxu0 0.0
  %203 = vmatpush2.msra.mxu0 0.0
  %204 = vmatprep.subr.mxu0 0.0
  %205 = vmatpush2.msra.mxu0 0.0
  %206 = vmatprep.subr.mxu0 0.0
  %207 = vmatpush2.msra.mxu0 0.0
  %208 = vmatprep.subr.mxu0 0.0
  %209 = vmatpush2.msra.mxu0 0.0
  %210 = vmatprep.subr.mxu0 0.0
  %211 = vmatpush2.msra.mxu0 0.0
  %212 = vmatprep.subr.mxu0 0.0
  %213 = vmatpush2.msra.mxu0 0.0
  %214 = vmatprep.subr.mxu0 0.0
  %215 = vmatpush2.msra.mxu0 0.0
  %216 = vmatprep.subr.mxu0 0.0
  %217 = vmatpush2.msra.mxu0 0.0
  %218 = vmatprep.subr.mxu0 0.0
  %219 = vmatpush2.msra.mxu0 0.0
  %220 = vmatprep.subr.mxu0 0.0
  %221 = vmatpush2.msra.mxu0 0.0
  %222 = vmatprep.mubr.f32.mxu0 0.0
  %223 = vmatmul.mubr.f32.gmra.mxu0 %v75
  %v224 = vpop.f32.mrf.mxu0
  %v225 = vadd.f32 %v69, %v224
  %v226 = vpop.f32.mrf.mxu0
  %227 = vdwg.mxu0
  %v228 = vmax.f32 %v154, 0.0
  %v229 = vmax.f32 %v156, 0.0
  %v230 = vmax.f32 %v225, 0.0
  %v231 = vld [vmem:[%s3] sm:$0xff]
  %v232 = vld [vmem:[%s3 + $0x8] sm:$0xff]
  %v233 = vld [vmem:[%s3 + $0x10] sm:$0xff]
  %v234 = vld [vmem:[%s3 + $0x18] sm:$0xff]
  %v235 = vld [vmem:[%s3 + $0x20] sm:$0xff]
  %v236 = vld [vmem:[%s3 + $0x28] sm:$0xff]
  %v237 = vld [vmem:[%s3 + $0x30] sm:$0xff]
  %v238 = vld [vmem:[%s3 + $0x38] sm:$0xff]
  %v239 = vld [vmem:[%s3 + $0x40] sm:$0xff]
  %v240 = vld [vmem:[%s3 + $0x48] sm:$0xff]
  %v241 = vld [vmem:[%s3 + $0x50] sm:$0xff]
  %v242 = vld [vmem:[%s3 + $0x58] sm:$0xff]
  %v243 = vld [vmem:[%s3 + $0x60] sm:$0xff]
  %v244 = vld [vmem:[%s3 + $0x68] sm:$0xff]
  %v245 = vld [vmem:[%s3 + $0x70] sm:$0xff]
  %v246 = vld [vmem:[%s3 + $0x78] sm:$0xff]
  %v247 = vld [vmem:[%s3 + $0x80] sm:$0xff]
  %v248 = vld [vmem:[%s3 + $0x88] sm:$0xff]
  %v249 = vld [vmem:[%s3 + $0x90] sm:$0xff]
  %v250 = vld [vmem:[%s3 + $0x98] sm:$0xff]
  %v251 = vld [vmem:[%s3 + $0xa0] sm:$0xff]
  %v252 = vld [vmem:[%s3 + $0xa8] sm:$0xff]
  %v253 = vld [vmem:[%s3 + $0xb0] sm:$0xff]
  %v254 = vld [vmem:[%s3 + $0xb8] sm:$0xff]
  %v255 = vld [vmem:[%s3 + $0xc0] sm:$0xff]
  %v256 = vld [vmem:[%s3 + $0xc8] sm:$0xff]
  %v257 = vld [vmem:[%s3 + $0xd0] sm:$0xff]
  %v258 = vld [vmem:[%s3 + $0xd8] sm:$0xff]
  %v259 = vld [vmem:[%s3 + $0xe0] sm:$0xff]
  %v260 = vld [vmem:[%s3 + $0xe8] sm:$0xff]
  %v261 = vld [vmem:[%s3 + $0xf0] sm:$0xff]
  %v262 = vld [vmem:[%s3 + $0xf8] sm:$0xff]
  %v263 = vld [vmem:[%s3 + $0x100] sm:$0xff]
  %v264 = vld [vmem:[%s3 + $0x108] sm:$0xff]
  %v265 = vld [vmem:[%s3 + $0x110] sm:$0xff]
  %v266 = vld [vmem:[%s3 + $0x118] sm:$0xff]
  %v267 = vld [vmem:[%s3 + $0x120] sm:$0xff]
  %v268 = vld [vmem:[%s3 + $0x128] sm:$0xff]
  %v269 = vld [vmem:[%s3 + $0x130] sm:$0xff]
  %v270 = vld [vmem:[%s3 + $0x138] sm:$0xff]
  %v271 = vld [vmem:[%s3 + $0x140] sm:$0xff]
  %v272 = vld [vmem:[%s3 + $0x148] sm:$0xff]
  %v273 = vld [vmem:[%s3 + $0x150] sm:$0xff]
  %v274 = vld [vmem:[%s3 + $0x158] sm:$0xff]
  %v275 = vld [vmem:[%s3 + $0x160] sm:$0xff]
  %v276 = vld [vmem:[%s3 + $0x168] sm:$0xff]
  %v277 = vld [vmem:[%s3 + $0x170] sm:$0xff]
  %v278 = vld [vmem:[%s3 + $0x178] sm:$0xff]
  %v279 = vld [vmem:[%s3 + $0x180] sm:$0xff]
  %v280 = vld [vmem:[%s3 + $0x188] sm:$0xff]
  %v281 = vld [vmem:[%s3 + $0x190] sm:$0xff]
  %v282 = vld [vmem:[%s3 + $0x198] sm:$0xff]
  %v283 = vld [vmem:[%s3 + $0x1a0] sm:$0xff]
  %v284 = vld [vmem:[%s3 + $0x1a8] sm:$0xff]
  %v285 = vld [vmem:[%s3 + $0x1b0] sm:$0xff]
  %v286 = vld [vmem:[%s3 + $0x1b8] sm:$0xff]
  %v287 = vld [vmem:[%s3 + $0x1c0] sm:$0xff]
  %v288 = vld [vmem:[%s3 + $0x1c8] sm:$0xff]
  %v289 = vld [vmem:[%s3 + $0x1d0] sm:$0xff]
  %v290 = vld [vmem:[%s3 + $0x1d8] sm:$0xff]
  %v291 = vld [vmem:[%s3 + $0x1e0] sm:$0xff]
  %v292 = vld [vmem:[%s3 + $0x1e8] sm:$0xff]
  %v293 = vld [vmem:[%s3 + $0x1f0] sm:$0xff]
  %v294 = vld [vmem:[%s3 + $0x1f8] sm:$0xff]
  %v295 = vld [vmem:[%s3 + $0x200] sm:$0xff]
  %v296 = vld [vmem:[%s3 + $0x208] sm:$0xff]
  %v297 = vld [vmem:[%s3 + $0x210] sm:$0xff]
  %v298 = vld [vmem:[%s3 + $0x218] sm:$0xff]
  %v299 = vld [vmem:[%s3 + $0x220] sm:$0xff]
  %v300 = vld [vmem:[%s3 + $0x228] sm:$0xff]
  %v301 = vld [vmem:[%s3 + $0x230] sm:$0xff]
  %v302 = vld [vmem:[%s3 + $0x238] sm:$0xff]
  %v303 = vld [vmem:[%s3 + $0x240] sm:$0xff]
  %v304 = vld [vmem:[%s3 + $0x248] sm:$0xff]
  %v305 = vld [vmem:[%s3 + $0x250] sm:$0xff]
  %v306 = vld [vmem:[%s3 + $0x258] sm:$0xff]
  %v307 = vld [vmem:[%s3 + $0x260] sm:$0xff]
  %v308 = vld [vmem:[%s3 + $0x268] sm:$0xff]
  %v309 = vld [vmem:[%s3 + $0x270] sm:$0xff]
  %v310 = vld [vmem:[%s3 + $0x278] sm:$0xff]
  %v311 = vld [vmem:[%s3 + $0x280] sm:$0xff]
  %v312 = vld [vmem:[%s3 + $0x288] sm:$0xff]
  %v313 = vld [vmem:[%s3 + $0x290] sm:$0xff]
  %v314 = vld [vmem:[%s3 + $0x298] sm:$0xff]
  %v315 = vld [vmem:[%s3 + $0x2a0] sm:$0xff]
  %v316 = vld [vmem:[%s3 + $0x2a8] sm:$0xff]
  %v317 = vld [vmem:[%s3 + $0x2b0] sm:$0xff]
  %v318 = vld [vmem:[%s3 + $0x2b8] sm:$0xff]
  %v319 = vld [vmem:[%s3 + $0x2c0] sm:$0xff]
  %v320 = vld [vmem:[%s3 + $0x2c8] sm:$0xff]
  %v321 = vld [vmem:[%s3 + $0x2d0] sm:$0xff]
  %v322 = vld [vmem:[%s3 + $0x2d8] sm:$0xff]
  %v323 = vld [vmem:[%s3 + $0x2e0] sm:$0xff]
  %v324 = vld [vmem:[%s3 + $0x2e8] sm:$0xff]
  %v325 = vld [vmem:[%s3 + $0x2f0] sm:$0xff]
  %v326 = vld [vmem:[%s3 + $0x2f8] sm:$0xff]
  %v327 = vld [vmem:[%s3 + $0x300] sm:$0xff]
  %v328 = vld [vmem:[%s3 + $0x308] sm:$0xff]
  %v329 = vld [vmem:[%s3 + $0x310] sm:$0xff]
  %v330 = vld [vmem:[%s3 + $0x318] sm:$0xff]
  %v331 = vld [vmem:[%s3 + $0x320] sm:$0xff]
  %v332 = vld [vmem:[%s3 + $0x328] sm:$0xff]
  %v333 = vld [vmem:[%s3 + $0x330] sm:$0xff]
  %v334 = vld [vmem:[%s3 + $0x338] sm:$0xff]
  %v335 = vld [vmem:[%s3 + $0x340] sm:$0xff]
  %v336 = vld [vmem:[%s3 + $0x348] sm:$0xff]
  %v337 = vld [vmem:[%s3 + $0x350] sm:$0xff]
  %v338 = vld [vmem:[%s3 + $0x358] sm:$0xff]
  %v339 = vld [vmem:[%s3 + $0x360] sm:$0xff]
  %v340 = vld [vmem:[%s3 + $0x368] sm:$0xff]
  %v341 = vld [vmem:[%s3 + $0x370] sm:$0xff]
  %v342 = vld [vmem:[%s3 + $0x378] sm:$0xff]
  %v343 = vld [vmem:[%s3 + $0x380] sm:$0xff]
  %v344 = vld [vmem:[%s3 + $0x388] sm:$0xff]
  %v345 = vld [vmem:[%s3 + $0x390] sm:$0xff]
  %v346 = vld [vmem:[%s3 + $0x398] sm:$0xff]
  %v347 = vld [vmem:[%s3 + $0x3a0] sm:$0xff]
  %v348 = vld [vmem:[%s3 + $0x3a8] sm:$0xff]
  %v349 = vld [vmem:[%s3 + $0x3b0] sm:$0xff]
  %v350 = vld [vmem:[%s3 + $0x3b8] sm:$0xff]
  %v351 = vld [vmem:[%s3 + $0x3c0] sm:$0x1f]
  %v352 = vld [vmem:[%s3 + $0x3c8] sm:$0x1f]
  %v353 = vld [vmem:[%s3 + $0x3d0] sm:$0x1f]
  %v354 = vld [vmem:[%s4] sm:$0x7]
  %v356 = vlaneseq
  %v357 = vshrl.u32 %v356, 7
  %v358 = vsub.s32 0, %v357
  %v359 = vrot.slane %v354, %v358
  %v360 = vlaneseq
  %v361 = vshrl.u32 %v360, 7
  %v362 = vsub.s32 1, %v361
  %v363 = vrot.slane %v354, %v362
  %v364 = vlaneseq
  %v365 = vshrl.u32 %v364, 7
  %v366 = vsub.s32 2, %v365
  %v367 = vrot.slane %v354, %v366
  %v372 = vsel %vm73, %v230, 0
  %v375 = vsel %vm77, %v351, 0
  %v378 = vsel %vm77, %v352, 0
  %v381 = vsel %vm77, %v353, 0
  %383 = vmatprep.subr.mxu0 %v277
  %384 = vmatpush1.msra.mxu0 %v276
  %385 = vmatprep.subr.mxu0 %v274
  %386 = vmatpush1.msra.mxu0 %v273
  %387 = vmatprep.subr.mxu0 %v271
  %388 = vmatpush1.msra.mxu0 %v270
  %389 = vmatprep.subr.mxu0 %v268
  %390 = vmatpush1.msra.mxu0 %v267
  %391 = vmatprep.subr.mxu0 %v265
  %392 = vmatpush1.msra.mxu0 %v264
  %393 = vmatprep.subr.mxu0 %v262
  %394 = vmatpush1.msra.mxu0 %v261
  %395 = vmatprep.subr.mxu0 %v259
  %396 = vmatpush1.msra.mxu0 %v258
  %397 = vmatprep.subr.mxu0 %v256
  %398 = vmatpush1.msra.mxu0 %v255
  %399 = vmatprep.subr.mxu0 %v253
  %400 = vmatpush1.msra.mxu0 %v252
  %401 = vmatprep.subr.mxu0 %v250
  %402 = vmatpush1.msra.mxu0 %v249
  %403 = vmatprep.subr.mxu0 %v247
  %404 = vmatpush1.msra.mxu0 %v246
  %405 = vmatprep.subr.mxu0 %v244
  %406 = vmatpush1.msra.mxu0 %v243
  %407 = vmatprep.subr.mxu0 %v241
  %408 = vmatpush1.msra.mxu0 %v240
  %409 = vmatprep.subr.mxu0 %v238
  %410 = vmatpush1.msra.mxu0 %v237
  %411 = vmatprep.subr.mxu0 %v235
  %412 = vmatpush1.msra.mxu0 %v234
  %413 = vmatprep.subr.mxu0 %v232
  %414 = vmatpush1.msra.mxu0 %v231
  %415 = vmatprep.subr.mxu0 %v325
  %416 = vmatpush2.msra.mxu0 %v324
  %417 = vmatprep.subr.mxu0 %v322
  %418 = vmatpush2.msra.mxu0 %v321
  %419 = vmatprep.subr.mxu0 %v319
  %420 = vmatpush2.msra.mxu0 %v318
  %421 = vmatprep.subr.mxu0 %v316
  %422 = vmatpush2.msra.mxu0 %v315
  %423 = vmatprep.subr.mxu0 %v313
  %424 = vmatpush2.msra.mxu0 %v312
  %425 = vmatprep.subr.mxu0 %v310
  %426 = vmatpush2.msra.mxu0 %v309
  %427 = vmatprep.subr.mxu0 %v307
  %428 = vmatpush2.msra.mxu0 %v306
  %429 = vmatprep.subr.mxu0 %v304
  %430 = vmatpush2.msra.mxu0 %v303
  %431 = vmatprep.subr.mxu0 %v301
  %432 = vmatpush2.msra.mxu0 %v300
  %433 = vmatprep.subr.mxu0 %v298
  %434 = vmatpush2.msra.mxu0 %v297
  %435 = vmatprep.subr.mxu0 %v295
  %436 = vmatpush2.msra.mxu0 %v294
  %437 = vmatprep.subr.mxu0 %v292
  %438 = vmatpush2.msra.mxu0 %v291
  %439 = vmatprep.subr.mxu0 %v289
  %440 = vmatpush2.msra.mxu0 %v288
  %441 = vmatprep.subr.mxu0 %v286
  %442 = vmatpush2.msra.mxu0 %v285
  %443 = vmatprep.subr.mxu0 %v283
  %444 = vmatpush2.msra.mxu0 %v282
  %445 = vmatprep.subr.mxu0 %v280
  %446 = vmatpush2.msra.mxu0 %v279
  %447 = vmatprep.mubr.f32.mxu0 %v229
  %448 = vmatmul.mubr.f32.gmra.mxu0 %v228
  %v449 = vpop.f32.mrf.mxu0
  %v450 = vadd.f32 %v359, %v449
  %v451 = vpop.f32.mrf.mxu0
  %v452 = vadd.f32 %v363, %v451
  %453 = vdwg.mxu0
  %454 = vmatprep.subr.mxu0 0.0
  %455 = vmatpush1.msra.mxu0 0.0
  %456 = vmatprep.subr.mxu0 0.0
  %457 = vmatpush1.msra.mxu0 0.0
  %458 = vmatprep.subr.mxu0 0.0
  %459 = vmatpush1.msra.mxu0 0.0
  %460 = vmatprep.subr.mxu0 0.0
  %461 = vmatpush1.msra.mxu0 0.0
  %462 = vmatprep.subr.mxu0 0.0
  %463 = vmatpush1.msra.mxu0 0.0
  %464 = vmatprep.subr.mxu0 0.0
  %465 = vmatpush1.msra.mxu0 0.0
  %466 = vmatprep.subr.mxu0 0.0
  %467 = vmatpush1.msra.mxu0 0.0
  %468 = vmatprep.subr.mxu0 %v378
  %469 = vmatpush1.msra.mxu0 %v375
  %470 = vmatprep.subr.mxu0 %v349
  %471 = vmatpush1.msra.mxu0 %v348
  %472 = vmatprep.subr.mxu0 %v346
  %473 = vmatpush1.msra.mxu0 %v345
  %474 = vmatprep.subr.mxu0 %v343
  %475 = vmatpush1.msra.mxu0 %v342
  %476 = vmatprep.subr.mxu0 %v340
  %477 = vmatpush1.msra.mxu0 %v339
  %478 = vmatprep.subr.mxu0 %v337
  %479 = vmatpush1.msra.mxu0 %v336
  %480 = vmatprep.subr.mxu0 %v334
  %481 = vmatpush1.msra.mxu0 %v333
  %482 = vmatprep.subr.mxu0 %v331
  %483 = vmatpush1.msra.mxu0 %v330
  %484 = vmatprep.subr.mxu0 %v328
  %485 = vmatpush1.msra.mxu0 %v327
  %486 = vmatprep.subr.mxu0 0.0
  %487 = vmatpush2.msra.mxu0 0.0
  %488 = vmatprep.subr.mxu0 0.0
  %489 = vmatpush2.msra.mxu0 0.0
  %490 = vmatprep.subr.mxu0 0.0
  %491 = vmatpush2.msra.mxu0 0.0
  %492 = vmatprep.subr.mxu0 0.0
  %493 = vmatpush2.msra.mxu0 0.0
  %494 = vmatprep.subr.mxu0 0.0
  %495 = vmatpush2.msra.mxu0 0.0
  %496 = vmatprep.subr.mxu0 0.0
  %497 = vmatpush2.msra.mxu0 0.0
  %498 = vmatprep.subr.mxu0 0.0
  %499 = vmatpush2.msra.mxu0 0.0
  %500 = vmatprep.subr.mxu0 0.0
  %501 = vmatpush2.msra.mxu0 0.0
  %502 = vmatprep.subr.mxu0 0.0
  %503 = vmatpush2.msra.mxu0 0.0
  %504 = vmatprep.subr.mxu0 0.0
  %505 = vmatpush2.msra.mxu0 0.0
  %506 = vmatprep.subr.mxu0 0.0
  %507 = vmatpush2.msra.mxu0 0.0
  %508 = vmatprep.subr.mxu0 0.0
  %509 = vmatpush2.msra.mxu0 0.0
  %510 = vmatprep.subr.mxu0 0.0
  %511 = vmatpush2.msra.mxu0 0.0
  %512 = vmatprep.subr.mxu0 0.0
  %513 = vmatpush2.msra.mxu0 0.0
  %514 = vmatprep.subr.mxu0 0.0
  %515 = vmatpush2.msra.mxu0 0.0
  %516 = vmatprep.subr.mxu0 0.0
  %517 = vmatpush2.msra.mxu0 0.0
  %518 = vmatprep.mubr.f32.mxu0 0.0
  %519 = vmatmul.mubr.f32.gmra.mxu0 %v372
  %v520 = vpop.f32.mrf.mxu0
  %v521 = vadd.f32 %v450, %v520
  %v522 = vpop.f32.mrf.mxu0
  %v523 = vadd.f32 %v452, %v522
  %524 = vdwg.mxu0
  %525 = vmatprep.subr.mxu0 0.0
  %526 = vmatpush1.msra.mxu0 %v278
  %527 = vmatprep.subr.mxu0 0.0
  %528 = vmatpush1.msra.mxu0 %v275
  %529 = vmatprep.subr.mxu0 0.0
  %530 = vmatpush1.msra.mxu0 %v272
  %531 = vmatprep.subr.mxu0 0.0
  %532 = vmatpush1.msra.mxu0 %v269
  %533 = vmatprep.subr.mxu0 0.0
  %534 = vmatpush1.msra.mxu0 %v266
  %535 = vmatprep.subr.mxu0 0.0
  %536 = vmatpush1.msra.mxu0 %v263
  %537 = vmatprep.subr.mxu0 0.0
  %538 = vmatpush1.msra.mxu0 %v260
  %539 = vmatprep.subr.mxu0 0.0
  %540 = vmatpush1.msra.mxu0 %v257
  %541 = vmatprep.subr.mxu0 0.0
  %542 = vmatpush1.msra.mxu0 %v254
  %543 = vmatprep.subr.mxu0 0.0
  %544 = vmatpush1.msra.mxu0 %v251
  %545 = vmatprep.subr.mxu0 0.0
  %546 = vmatpush1.msra.mxu0 %v248
  %547 = vmatprep.subr.mxu0 0.0
  %548 = vmatpush1.msra.mxu0 %v245
  %549 = vmatprep.subr.mxu0 0.0
  %550 = vmatpush1.msra.mxu0 %v242
  %551 = vmatprep.subr.mxu0 0.0
  %552 = vmatpush1.msra.mxu0 %v239
  %553 = vmatprep.subr.mxu0 0.0
  %554 = vmatpush1.msra.mxu0 %v236
  %555 = vmatprep.subr.mxu0 0.0
  %556 = vmatpush1.msra.mxu0 %v233
  %557 = vmatprep.subr.mxu0 0.0
  %558 = vmatpush2.msra.mxu0 %v326
  %559 = vmatprep.subr.mxu0 0.0
  %560 = vmatpush2.msra.mxu0 %v323
  %561 = vmatprep.subr.mxu0 0.0
  %562 = vmatpush2.msra.mxu0 %v320
  %563 = vmatprep.subr.mxu0 0.0
  %564 = vmatpush2.msra.mxu0 %v317
  %565 = vmatprep.subr.mxu0 0.0
  %566 = vmatpush2.msra.mxu0 %v314
  %567 = vmatprep.subr.mxu0 0.0
  %568 = vmatpush2.msra.mxu0 %v311
  %569 = vmatprep.subr.mxu0 0.0
  %570 = vmatpush2.msra.mxu0 %v308
  %571 = vmatprep.subr.mxu0 0.0
  %572 = vmatpush2.msra.mxu0 %v305
  %573 = vmatprep.subr.mxu0 0.0
  %574 = vmatpush2.msra.mxu0 %v302
  %575 = vmatprep.subr.mxu0 0.0
  %576 = vmatpush2.msra.mxu0 %v299
  %577 = vmatprep.subr.mxu0 0.0
  %578 = vmatpush2.msra.mxu0 %v296
  %579 = vmatprep.subr.mxu0 0.0
  %580 = vmatpush2.msra.mxu0 %v293
  %581 = vmatprep.subr.mxu0 0.0
  %582 = vmatpush2.msra.mxu0 %v290
  %583 = vmatprep.subr.mxu0 0.0
  %584 = vmatpush2.msra.mxu0 %v287
  %585 = vmatprep.subr.mxu0 0.0
  %586 = vmatpush2.msra.mxu0 %v284
  %587 = vmatprep.subr.mxu0 0.0
  %588 = vmatpush2.msra.mxu0 %v281
  %589 = vmatprep.mubr.f32.mxu0 %v229
  %590 = vmatmul.mubr.f32.gmra.mxu0 %v228
  %v591 = vpop.f32.mrf.mxu0
  %v592 = vadd.f32 %v367, %v591
  %v593 = vpop.f32.mrf.mxu0
  %594 = vdwg.mxu0
  %595 = vmatprep.subr.mxu0 0.0
  %596 = vmatpush1.msra.mxu0 0.0
  %597 = vmatprep.subr.mxu0 0.0
  %598 = vmatpush1.msra.mxu0 0.0
  %599 = vmatprep.subr.mxu0 0.0
  %600 = vmatpush1.msra.mxu0 0.0
  %601 = vmatprep.subr.mxu0 0.0
  %602 = vmatpush1.msra.mxu0 0.0
  %603 = vmatprep.subr.mxu0 0.0
  %604 = vmatpush1.msra.mxu0 0.0
  %605 = vmatprep.subr.mxu0 0.0
  %606 = vmatpush1.msra.mxu0 0.0
  %607 = vmatprep.subr.mxu0 0.0
  %608 = vmatpush1.msra.mxu0 0.0
  %609 = vmatprep.subr.mxu0 0.0
  %610 = vmatpush1.msra.mxu0 %v381
  %611 = vmatprep.subr.mxu0 0.0
  %612 = vmatpush1.msra.mxu0 %v350
  %613 = vmatprep.subr.mxu0 0.0
  %614 = vmatpush1.msra.mxu0 %v347
  %615 = vmatprep.subr.mxu0 0.0
  %616 = vmatpush1.msra.mxu0 %v344
  %617 = vmatprep.subr.mxu0 0.0
  %618 = vmatpush1.msra.mxu0 %v341
  %619 = vmatprep.subr.mxu0 0.0
  %620 = vmatpush1.msra.mxu0 %v338
  %621 = vmatprep.subr.mxu0 0.0
  %622 = vmatpush1.msra.mxu0 %v335
  %623 = vmatprep.subr.mxu0 0.0
  %624 = vmatpush1.msra.mxu0 %v332
  %625 = vmatprep.subr.mxu0 0.0
  %626 = vmatpush1.msra.mxu0 %v329
  %627 = vmatprep.subr.mxu0 0.0
  %628 = vmatpush2.msra.mxu0 0.0
  %629 = vmatprep.subr.mxu0 0.0
  %630 = vmatpush2.msra.mxu0 0.0
  %631 = vmatprep.subr.mxu0 0.0
  %632 = vmatpush2.msra.mxu0 0.0
  %633 = vmatprep.subr.mxu0 0.0
  %634 = vmatpush2.msra.mxu0 0.0
  %635 = vmatprep.subr.mxu0 0.0
  %636 = vmatpush2.msra.mxu0 0.0
  %637 = vmatprep.subr.mxu0 0.0
  %638 = vmatpush2.msra.mxu0 0.0
  %639 = vmatprep.subr.mxu0 0.0
  %640 = vmatpush2.msra.mxu0 0.0
  %641 = vmatprep.subr.mxu0 0.0
  %642 = vmatpush2.msra.mxu0 0.0
  %643 = vmatprep.subr.mxu0 0.0
  %644 = vmatpush2.msra.mxu0 0.0
  %645 = vmatprep.subr.mxu0 0.0
  %646 = vmatpush2.msra.mxu0 0.0
  %647 = vmatprep.subr.mxu0 0.0
  %648 = vmatpush2.msra.mxu0 0.0
  %649 = vmatprep.subr.mxu0 0.0
  %650 = vmatpush2.msra.mxu0 0.0
  %651 = vmatprep.subr.mxu0 0.0
  %652 = vmatpush2.msra.mxu0 0.0
  %653 = vmatprep.subr.mxu0 0.0
  %654 = vmatpush2.msra.mxu0 0.0
  %655 = vmatprep.subr.mxu0 0.0
  %656 = vmatpush2.msra.mxu0 0.0
  %657 = vmatprep.subr.mxu0 0.0
  %658 = vmatpush2.msra.mxu0 0.0
  %659 = vmatprep.mubr.f32.mxu0 0.0
  %660 = vmatmul.mubr.f32.gmra.mxu0 %v372
  %v661 = vpop.f32.mrf.mxu0
  %v662 = vadd.f32 %v592, %v661
  %v663 = vpop.f32.mrf.mxu0
  %664 = vdwg.mxu0
  %v665 = vmax.f32 %v521, 0.0
  %v666 = vmax.f32 %v523, 0.0
  %v667 = vmax.f32 %v662, 0.0
  %v668 = vld [vmem:[%s5] sm:$0xff]
  %v669 = vld [vmem:[%s5 + $0x8] sm:$0xff]
  %v670 = vld [vmem:[%s5 + $0x10] sm:$0xff]
  %v671 = vld [vmem:[%s5 + $0x18] sm:$0xff]
  %v672 = vld [vmem:[%s5 + $0x20] sm:$0xff]
  %v673 = vld [vmem:[%s5 + $0x28] sm:$0xff]
  %v674 = vld [vmem:[%s5 + $0x30] sm:$0xff]
  %v675 = vld [vmem:[%s5 + $0x38] sm:$0xff]
  %v676 = vld [vmem:[%s5 + $0x40] sm:$0xff]
  %v677 = vld [vmem:[%s5 + $0x48] sm:$0xff]
  %v678 = vld [vmem:[%s5 + $0x50] sm:$0xff]
  %v679 = vld [vmem:[%s5 + $0x58] sm:$0xff]
  %v680 = vld [vmem:[%s5 + $0x60] sm:$0xff]
  %v681 = vld [vmem:[%s5 + $0x68] sm:$0xff]
  %v682 = vld [vmem:[%s5 + $0x70] sm:$0xff]
  %v683 = vld [vmem:[%s5 + $0x78] sm:$0xff]
  %v684 = vld [vmem:[%s5 + $0x80] sm:$0xff]
  %v685 = vld [vmem:[%s5 + $0x88] sm:$0xff]
  %v686 = vld [vmem:[%s5 + $0x90] sm:$0xff]
  %v687 = vld [vmem:[%s5 + $0x98] sm:$0xff]
  %v688 = vld [vmem:[%s5 + $0xa0] sm:$0xff]
  %v689 = vld [vmem:[%s5 + $0xa8] sm:$0xff]
  %v690 = vld [vmem:[%s5 + $0xb0] sm:$0xff]
  %v691 = vld [vmem:[%s5 + $0xb8] sm:$0xff]
  %v692 = vld [vmem:[%s5 + $0xc0] sm:$0xff]
  %v693 = vld [vmem:[%s5 + $0xc8] sm:$0xff]
  %v694 = vld [vmem:[%s5 + $0xd0] sm:$0xff]
  %v695 = vld [vmem:[%s5 + $0xd8] sm:$0xff]
  %v696 = vld [vmem:[%s5 + $0xe0] sm:$0xff]
  %v697 = vld [vmem:[%s5 + $0xe8] sm:$0xff]
  %v698 = vld [vmem:[%s5 + $0xf0] sm:$0xff]
  %v699 = vld [vmem:[%s5 + $0xf8] sm:$0xff]
  %v700 = vld [vmem:[%s5 + $0x100] sm:$0xff]
  %v701 = vld [vmem:[%s5 + $0x108] sm:$0xff]
  %v702 = vld [vmem:[%s5 + $0x110] sm:$0xff]
  %v703 = vld [vmem:[%s5 + $0x118] sm:$0xff]
  %v704 = vld [vmem:[%s5 + $0x120] sm:$0xff]
  %v705 = vld [vmem:[%s5 + $0x128] sm:$0xff]
  %v706 = vld [vmem:[%s5 + $0x130] sm:$0x1]
  %v707 = vld [vmem:[#allocation2] sm:$0x1]
  %v709 = vlaneseq
  %v710 = vshrl.u32 %v709, 7
  %v711 = vsub.s32 0, %v710
  %v712 = vrot.slane %v707, %v711
  %vm714 = vcmask 400384
  %v716 = vsel %vm714, %v667, 0
  %vm718 = vcmask 1040384
  %v720 = vsel %vm718, %v706, 0
  %722 = vmatprep.subr.mxu0 0.0
  %723 = vmatpush1.msra.mxu0 %v683
  %724 = vmatprep.subr.mxu0 0.0
  %725 = vmatpush1.msra.mxu0 %v682
  %726 = vmatprep.subr.mxu0 0.0
  %727 = vmatpush1.msra.mxu0 %v681
  %728 = vmatprep.subr.mxu0 0.0
  %729 = vmatpush1.msra.mxu0 %v680
  %730 = vmatprep.subr.mxu0 0.0
  %731 = vmatpush1.msra.mxu0 %v679
  %732 = vmatprep.subr.mxu0 0.0
  %733 = vmatpush1.msra.mxu0 %v678
  %734 = vmatprep.subr.mxu0 0.0
  %735 = vmatpush1.msra.mxu0 %v677
  %736 = vmatprep.subr.mxu0 0.0
  %737 = vmatpush1.msra.mxu0 %v676
  %738 = vmatprep.subr.mxu0 0.0
  %739 = vmatpush1.msra.mxu0 %v675
  %740 = vmatprep.subr.mxu0 0.0
  %741 = vmatpush1.msra.mxu0 %v674
  %742 = vmatprep.subr.mxu0 0.0
  %743 = vmatpush1.msra.mxu0 %v673
  %744 = vmatprep.subr.mxu0 0.0
  %745 = vmatpush1.msra.mxu0 %v672
  %746 = vmatprep.subr.mxu0 0.0
  %747 = vmatpush1.msra.mxu0 %v671
  %748 = vmatprep.subr.mxu0 0.0
  %749 = vmatpush1.msra.mxu0 %v670
  %750 = vmatprep.subr.mxu0 0.0
  %751 = vmatpush1.msra.mxu0 %v669
  %752 = vmatprep.subr.mxu0 0.0
  %753 = vmatpush1.msra.mxu0 %v668
  %754 = vmatprep.subr.mxu0 0.0
  %755 = vmatpush2.msra.mxu0 %v699
  %756 = vmatprep.subr.mxu0 0.0
  %757 = vmatpush2.msra.mxu0 %v698
  %758 = vmatprep.subr.mxu0 0.0
  %759 = vmatpush2.msra.mxu0 %v697
  %760 = vmatprep.subr.mxu0 0.0
  %761 = vmatpush2.msra.mxu0 %v696
  %762 = vmatprep.subr.mxu0 0.0
  %763 = vmatpush2.msra.mxu0 %v695
  %764 = vmatprep.subr.mxu0 0.0
  %765 = vmatpush2.msra.mxu0 %v694
  %766 = vmatprep.subr.mxu0 0.0
  %767 = vmatpush2.msra.mxu0 %v693
  %768 = vmatprep.subr.mxu0 0.0
  %769 = vmatpush2.msra.mxu0 %v692
  %770 = vmatprep.subr.mxu0 0.0
  %771 = vmatpush2.msra.mxu0 %v691
  %772 = vmatprep.subr.mxu0 0.0
  %773 = vmatpush2.msra.mxu0 %v690
  %774 = vmatprep.subr.mxu0 0.0
  %775 = vmatpush2.msra.mxu0 %v689
  %776 = vmatprep.subr.mxu0 0.0
  %777 = vmatpush2.msra.mxu0 %v688
  %778 = vmatprep.subr.mxu0 0.0
  %779 = vmatpush2.msra.mxu0 %v687
  %780 = vmatprep.subr.mxu0 0.0
  %781 = vmatpush2.msra.mxu0 %v686
  %782 = vmatprep.subr.mxu0 0.0
  %783 = vmatpush2.msra.mxu0 %v685
  %784 = vmatprep.subr.mxu0 0.0
  %785 = vmatpush2.msra.mxu0 %v684
  %786 = vmatprep.mubr.f32.mxu0 %v666
  %787 = vmatmul.mubr.f32.gmra.mxu0 %v665
  %v788 = vpop.f32.mrf.mxu0
  %v789 = vadd.f32 %v712, %v788
  %v790 = vpop.f32.mrf.mxu0
  %791 = vdwg.mxu0
  %792 = vmatprep.subr.mxu0 0.0
  %793 = vmatpush1.msra.mxu0 0.0
  %794 = vmatprep.subr.mxu0 0.0
  %795 = vmatpush1.msra.mxu0 0.0
  %796 = vmatprep.subr.mxu0 0.0
  %797 = vmatpush1.msra.mxu0 0.0
  %798 = vmatprep.subr.mxu0 0.0
  %799 = vmatpush1.msra.mxu0 0.0
  %800 = vmatprep.subr.mxu0 0.0
  %801 = vmatpush1.msra.mxu0 0.0
  %802 = vmatprep.subr.mxu0 0.0
  %803 = vmatpush1.msra.mxu0 0.0
  %804 = vmatprep.subr.mxu0 0.0
  %805 = vmatpush1.msra.mxu0 0.0
  %806 = vmatprep.subr.mxu0 0.0
  %807 = vmatpush1.msra.mxu0 0.0
  %808 = vmatprep.subr.mxu0 0.0
  %809 = vmatpush1.msra.mxu0 0.0
  %810 = vmatprep.subr.mxu0 0.0
  %811 = vmatpush1.msra.mxu0 %v720
  %812 = vmatprep.subr.mxu0 0.0
  %813 = vmatpush1.msra.mxu0 %v705
  %814 = vmatprep.subr.mxu0 0.0
  %815 = vmatpush1.msra.mxu0 %v704
  %816 = vmatprep.subr.mxu0 0.0
  %817 = vmatpush1.msra.mxu0 %v703
  %818 = vmatprep.subr.mxu0 0.0
  %819 = vmatpush1.msra.mxu0 %v702
  %820 = vmatprep.subr.mxu0 0.0
  %821 = vmatpush1.msra.mxu0 %v701
  %822 = vmatprep.subr.mxu0 0.0
  %823 = vmatpush1.msra.mxu0 %v700
  %824 = vmatprep.subr.mxu0 0.0
  %825 = vmatpush2.msra.mxu0 0.0
  %826 = vmatprep.subr.mxu0 0.0
  %827 = vmatpush2.msra.mxu0 0.0
  %828 = vmatprep.subr.mxu0 0.0
  %829 = vmatpush2.msra.mxu0 0.0
  %830 = vmatprep.subr.mxu0 0.0
  %831 = vmatpush2.msra.mxu0 0.0
  %832 = vmatprep.subr.mxu0 0.0
  %833 = vmatpush2.msra.mxu0 0.0
  %834 = vmatprep.subr.mxu0 0.0
  %835 = vmatpush2.msra.mxu0 0.0
  %836 = vmatprep.subr.mxu0 0.0
  %837 = vmatpush2.msra.mxu0 0.0
  %838 = vmatprep.subr.mxu0 0.0
  %839 = vmatpush2.msra.mxu0 0.0
  %840 = vmatprep.subr.mxu0 0.0
  %841 = vmatpush2.msra.mxu0 0.0
  %842 = vmatprep.subr.mxu0 0.0
  %843 = vmatpush2.msra.mxu0 0.0
  %844 = vmatprep.subr.mxu0 0.0
  %845 = vmatpush2.msra.mxu0 0.0
  %846 = vmatprep.subr.mxu0 0.0
  %847 = vmatpush2.msra.mxu0 0.0
  %848 = vmatprep.subr.mxu0 0.0
  %849 = vmatpush2.msra.mxu0 0.0
  %850 = vmatprep.subr.mxu0 0.0
  %851 = vmatpush2.msra.mxu0 0.0
  %852 = vmatprep.subr.mxu0 0.0
  %853 = vmatpush2.msra.mxu0 0.0
  %854 = vmatprep.subr.mxu0 0.0
  %855 = vmatpush2.msra.mxu0 0.0
  %856 = vmatprep.mubr.f32.mxu0 0.0
  %857 = vmatmul.mubr.f32.gmra.mxu0 %v716
  %v858 = vpop.f32.mrf.mxu0
  %v859 = vadd.f32 %v789, %v858
  %v860 = vpop.f32.mrf.mxu0
  %861 = vdwg.mxu0
  %v862 = vsub.f32 0.0, %v859
  %v863 = vmul.f32 %v862, 1.442695
  %v864 = vpow.pop %v863
  %v865 = vadd.f32 %v864, 1.0
  %v866 = vrcp.pop %v865
  %v867 = vmul.f32 1.0, %v866
  %vm868 = vcmask 7168
  %869 = vst.msk [vmem:[%s7] sm:$0xff] %vm868, %v867
  // Predicated region
  $region30: #{tpu_custom_call.1} parent=0 // pred_check
    _
  $region31: #{tpu_custom_call.1} parent=0 // pred_check_branch
    %871 = sbr.rel (0) target = $region33
  $region32: #{tpu_custom_call.1} parent=0 // pred_region
    _
  $region33: #{tpu_custom_call.1} parent=0 // pred_fallthru
    _
  // Predicated region
  $region34: #{tpu_custom_call.1} parent=0 // pred_check
    _
  $region35: #{tpu_custom_call.1} parent=0 // pred_check_branch
    %873 = sbr.rel (0) target = $region37
  $region36: #{tpu_custom_call.1} parent=0 // pred_region
    _
  $region37: #{tpu_custom_call.1} parent=0 // pred_fallthru
    _

</llo_original>
